<compile_context>
chip_gen: v5e
topology: v5e:2x2
jax: 0.10.0
libtpu: 0.0.40
codegen_flags: <defaults>
</compile_context>

<pallas_src>
import jax
import jax.numpy as jnp
from jax.experimental import pallas as pl
from jax.experimental.pallas import tpu as pltpu


def _linear_kernel(x_ref, w_ref, b_ref, o_ref, acc_ref):
    """Grid step (i, j, k): acc += x[i,k] @ w[k,j]; bias seeded at k==0; store at last k."""
    k = pl.program_id(2)

    @pl.when(k == 0)
    def _():
        # Seed the f32 accumulator with the broadcast bias (exact, one store path).
        acc_ref[...] = jnp.broadcast_to(b_ref[...], acc_ref.shape).astype(jnp.float32)

    # (tm, tk) @ (tk, tn) -> (tm, tn), f32 accumulation on the MXU.
    acc_ref[...] += jnp.dot(x_ref[...], w_ref[...], preferred_element_type=jnp.float32)

    @pl.when(k == pl.num_programs(2) - 1)
    def _():
        o_ref[...] = acc_ref[...].astype(o_ref.dtype)


def _round_up(x, m):
    return ((x + m - 1) // m) * m


def _largest_aligned_divisor(dim, max_tile, align=128):
    """Largest multiple of `align` that divides `dim` and is <= max_tile (or None)."""
    if dim % align != 0:
        return None
    best = None
    t = align
    while t <= min(dim, max_tile):
        if dim % t == 0:
            best = t
        t += align
    return best


def prepare_projector_params(weight, bias, *, tn_max=512, tk_max=1024,
                             compute_dtype=jnp.float32):
    """One-time parameter prep (cache this outside the hot path).

    weight: (O, F) float32 (PyTorch nn.Linear convention)
    bias:   (O,)   float32

    Transposes weight to (F, O), zero-pads to tile multiples (exact along the
    reduction axis), optionally casts to bf16, and chooses MXU-friendly tiles.
    """
    O, F = weight.shape
    assert bias.shape == (O,)

    # K (reduction) tile: full extent if small, else a 128-aligned divisor of F
    # (no padding), else tk_max with one-time zero padding (exact).
    if F <= tk_max:
        tk, Fp = F, F
    else:
        tk = _largest_aligned_divisor(F, tk_max) or tk_max
        Fp = _round_up(F, tk)

    # N (output) tile: prefer >= 2 j-blocks so the grid shards across both
    # TensorCores on v7x even when the batch fits a single i-block.
    if O <= 256:
        tn, Op = O, O
    else:
        tn = min(tn_max, max(128, (O // 2 // 128) * 128))
        tn = _largest_aligned_divisor(O, tn) or tn
        Op = _round_up(O, tn)

    w_t = jnp.transpose(weight)                                   # (F, O), once per model
    if (Fp, Op) != (F, O):
        w_t = jnp.pad(w_t, ((0, Fp - F), (0, Op - O)))            # one-time, exact
    w_t = w_t.astype(compute_dtype)
    b = bias.reshape(1, O).astype(jnp.float32)
    if Op != O:
        b = jnp.pad(b, ((0, 0), (0, Op - O)))

    return {
        "w_t": w_t, "b": b, "tn": tn, "tk": tk,
        "out_dim": O, "in_dim": F, "compute_dtype": compute_dtype,
    }


def projector_forward(x, params, *, tm_max=512):
    """y = x @ weight.T + bias via a Pallas tiled-matmul kernel.

    x: (B, F) float32; params from prepare_projector_params; returns (B, O) in x.dtype.
    """
    w_t, b = params["w_t"], params["b"]
    tn, tk = params["tn"], params["tk"]
    O, F = params["out_dim"], params["in_dim"]
    compute_dtype = params["compute_dtype"]

    B, Fx = x.shape
    assert Fx == F
    Fp, Op = w_t.shape
    out_dtype = x.dtype

    # M tile: full extent for small batches (no padding). For large B, grow tm
    # first (weight HBM traffic scales with the number of i blocks).
    if B <= tm_max:
        tm, Bp, xp = B, B, x
    else:
        tm = tm_max
        Bp = _round_up(B, tm)
        xp = jnp.pad(x, ((0, Bp - B), (0, 0))) if Bp != B else x
    if Fp != F:
        xp = jnp.pad(xp, ((0, 0), (0, Fp - F)))   # zeros along K are exact
    xp = xp.astype(compute_dtype)

    grid = (Bp // tm, Op // tn, Fp // tk)

    itemsize = jnp.dtype(compute_dtype).itemsize
    cost = pl.CostEstimate(
        flops=2 * B * F * O,
        transcendentals=0,
        bytes_accessed=(B * F + F * O) * itemsize + O * 4
        + B * O * jnp.dtype(out_dtype).itemsize,
    )

    out = pl.pallas_call(
        _linear_kernel,
        out_shape=jax.ShapeDtypeStruct((Bp, Op), out_dtype),
        grid_spec=pltpu.PrefetchScalarGridSpec(
            num_scalar_prefetch=0,
            grid=grid,
            in_specs=[
                pl.BlockSpec((tm, tk), lambda i, j, k: (i, k)),   # x tile
                pl.BlockSpec((tk, tn), lambda i, j, k: (k, j)),   # pre-transposed weight tile
                pl.BlockSpec((1, tn), lambda i, j, k: (0, j)),    # bias tile
            ],
            out_specs=pl.BlockSpec((tm, tn), lambda i, j, k: (i, j)),
            scratch_shapes=[pltpu.VMEM((tm, tn), jnp.float32)],   # f32 accumulator
        ),
        compiler_params=pltpu.CompilerParams(
            dimension_semantics=("parallel", "parallel", "arbitrary"),
            vmem_limit_bytes=32 * 1024 * 1024,
        ),
        cost_estimate=cost,
    )(xp, w_t, b)

    if (Bp, Op) != (B, O):
        out = out[:B, :O]
    return out


if __name__ == "__main__":
    # Small, shape-consistent instantiation of Projector(feature_dim, output_dim).
    batch = 8
    feature_dim = 512
    output_dim = 384

    key = jax.random.PRNGKey(0)
    kx, kw, kb = jax.random.split(key, 3)

    x = jax.random.normal(kx, (batch, feature_dim), dtype=jnp.float32)
    # Deterministic init mimicking nn.Linear's uniform(-1/sqrt(F), 1/sqrt(F)).
    bound = 1.0 / (feature_dim ** 0.5)
    weight = jax.random.uniform(
        kw, (output_dim, feature_dim), minval=-bound, maxval=bound, dtype=jnp.float32
    )
    bias = jax.random.uniform(
        kb, (output_dim,), minval=-bound, maxval=bound, dtype=jnp.float32
    )

    y_ref = x @ weight.T + bias

    # Exact f32 path (nn.Linear semantics). tk_max=256 forces a 2-step reduction
    # so the k-accumulation / bias-seed / final-store paths are all exercised.
    params_f32 = prepare_projector_params(weight, bias, tk_max=256)
    y = projector_forward(x, params_f32)
    jax.block_until_ready(y)
    assert y.shape == (batch, output_dim)
    assert jnp.allclose(y, y_ref, atol=1e-4, rtol=1e-4)

    # bf16-input fast path (halved HBM traffic, native bf16 MXU, f32 accumulation).
    params_bf16 = prepare_projector_params(weight, bias, compute_dtype=jnp.bfloat16)
    y16 = projector_forward(x, params_bf16)
    jax.block_until_ready(y16)
    assert y16.shape == (batch, output_dim)
    assert jnp.allclose(y16, y_ref, atol=5e-2, rtol=5e-2)

    print("KERNEL_OK")
</pallas_src>

<mosaic_0001>
module attributes {stable_mosaic.version = 11 : i64} {
  func.func @_linear_kernel(%arg0: i32, %arg1: i32, %arg2: i32, %arg3: memref<8x256xf32, #tpu.memory_space<vmem>>, %arg4: memref<256x128xf32, #tpu.memory_space<vmem>>, %arg5: memref<1x128xf32, #tpu.memory_space<vmem>>, %arg6: memref<8x128xf32, #tpu.memory_space<vmem>>, %arg7: memref<8x128xf32, #tpu.memory_space<vmem>>) attributes {dimension_semantics = [#tpu.dimension_semantics<parallel>, #tpu.dimension_semantics<parallel>, #tpu.dimension_semantics<arbitrary>], iteration_bounds = array<i64: 1, 3, 2>, scalar_prefetch = 0 : i64, scratch_operands = 1 : i64, tpu.core_type = #tpu.core_type<tc>, window_params = [{transform_indices = @transform_0, window_bounds = array<i64: 8, 256>}, {transform_indices = @transform_1, window_bounds = array<i64: 256, 128>}, {transform_indices = @transform_2, window_bounds = array<i64: 1, 128>}, {transform_indices = @transform_3, window_bounds = array<i64: 8, 128>}]} {
    %c0_i32 = arith.constant 0 : i32
    %0 = arith.cmpi eq, %arg2, %c0_i32 : i32
    %1 = arith.extui %0 : i1 to i32
    %c0_i32_0 = arith.constant 0 : i32
    %2 = arith.cmpi ne, %1, %c0_i32_0 : i32
    scf.if %2 {
      %c0_9 = arith.constant 0 : index
      %c0_10 = arith.constant 0 : index
      %12 = vector.load %arg5[%c0_9, %c0_10] : memref<1x128xf32, #tpu.memory_space<vmem>>, vector<1x128xf32>
      %13 = vector.shape_cast %12 : vector<1x128xf32> to vector<1x128xf32>
      %14 = vector.broadcast %13 : vector<1x128xf32> to vector<8x128xf32>
      %c0_11 = arith.constant 0 : index
      %c0_12 = arith.constant 0 : index
      %15 = vector.load %arg7[%c0_11, %c0_12] : memref<8x128xf32, #tpu.memory_space<vmem>>, vector<8x128xf32>
      tpu.vector_store %arg7[%c0_11, %c0_12], %14 {strides = array<i32>} : memref<8x128xf32, #tpu.memory_space<vmem>>, vector<8x128xf32>,
    } else {
    }
    %c0 = arith.constant 0 : index
    %c0_1 = arith.constant 0 : index
    %3 = vector.load %arg7[%c0, %c0_1] : memref<8x128xf32, #tpu.memory_space<vmem>>, vector<8x128xf32>
    %c0_2 = arith.constant 0 : index
    %c0_3 = arith.constant 0 : index
    %4 = vector.load %arg3[%c0_2, %c0_3] : memref<8x256xf32, #tpu.memory_space<vmem>>, vector<8x256xf32>
    %c0_4 = arith.constant 0 : index
    %c0_5 = arith.constant 0 : index
    %5 = vector.load %arg4[%c0_4, %c0_5] : memref<256x128xf32, #tpu.memory_space<vmem>>, vector<256x128xf32>
    %cst = arith.constant dense<0.000000e+00> : vector<8x128xf32>
    %6 = tpu.matmul %4, %5, %cst {dimension_numbers = #tpu.dot_dimension_numbers<[1], [0], [0], [1], [0, 0, 1, 1], [], []>} : vector<8x256xf32>, vector<256x128xf32>, vector<8x128xf32> -> vector<8x128xf32>
    %7 = arith.addf %3, %6 : vector<8x128xf32>
    %c0_6 = arith.constant 0 : index
    %c0_7 = arith.constant 0 : index
    %8 = vector.load %arg7[%c0_6, %c0_7] : memref<8x128xf32, #tpu.memory_space<vmem>>, vector<8x128xf32>
    tpu.vector_store %arg7[%c0_6, %c0_7], %7 {strides = array<i32>} : memref<8x128xf32, #tpu.memory_space<vmem>>, vector<8x128xf32>,
    %c1_i32 = arith.constant 1 : i32
    %9 = arith.cmpi eq, %arg2, %c1_i32 : i32
    %10 = arith.extui %9 : i1 to i32
    %c0_i32_8 = arith.constant 0 : i32
    %11 = arith.cmpi ne, %10, %c0_i32_8 : i32
    scf.if %11 {
      %c0_9 = arith.constant 0 : index
      %c0_10 = arith.constant 0 : index
      %12 = vector.load %arg7[%c0_9, %c0_10] : memref<8x128xf32, #tpu.memory_space<vmem>>, vector<8x128xf32>
      %c0_11 = arith.constant 0 : index
      %c0_12 = arith.constant 0 : index
      %13 = vector.load %arg6[%c0_11, %c0_12] : memref<8x128xf32, #tpu.memory_space<vmem>>, vector<8x128xf32>
      tpu.vector_store %arg6[%c0_11, %c0_12], %12 {strides = array<i32>} : memref<8x128xf32, #tpu.memory_space<vmem>>, vector<8x128xf32>,
    } else {
    }
    return
  }
  func.func @transform_0(%arg0: i32, %arg1: i32, %arg2: i32) -> (i32, i32) {
    %c0_i32 = arith.constant 0 : i32
    return %arg0, %arg2 : i32, i32
  }
  func.func @transform_1(%arg0: i32, %arg1: i32, %arg2: i32) -> (i32, i32) {
    %c0_i32 = arith.constant 0 : i32
    return %arg2, %arg1 : i32, i32
  }
  func.func @transform_2(%arg0: i32, %arg1: i32, %arg2: i32) -> (i32, i32) {
    %c0_i32 = arith.constant 0 : i32
    %c0_i32_0 = arith.constant 0 : i32
    return %c0_i32, %arg1 : i32, i32
  }
  func.func @transform_3(%arg0: i32, %arg1: i32, %arg2: i32) -> (i32, i32) {
    %c0_i32 = arith.constant 0 : i32
    return %arg0, %arg1 : i32, i32
  }
}

</mosaic_0001>

<llo_original>
// kernel: tpu_custom_call.1
$region0: #{tpu_custom_call.1}
  #allocation0 [shape = 'u32[]', space=smem, size = 0x4, offset = 0x4, fixed_abs, tag = 'smem constant byte address 0x4 - core index']
  #allocation1 [shape = 'u32[72,128]{1,0:T(1,128)}', space=vmem, size = 0x9000, scoped, tag = 'internal scratch']
  #allocation2 [shape = 'f32[8,128]{1,0:T(8,128)}', space=vmem, size = 0x1000, scoped, tag = 'scratch operand']
  %s0 = inlined_call_operand.hbm [shape: f32[8,512], index: 0, kind: input, shape index: {}]
  %s1 = inlined_call_operand.hbm [shape: f32[512,384], index: 1, kind: input, shape index: {}]
  %s2 = inlined_call_operand.hbm [shape: f32[1,384], index: 2, kind: input, shape index: {}]
  %s3 = inlined_call_operand.hbm [shape: f32[8,384], index: 3, kind: output, shape index: {}]
  %s4 = sld [smem:[#allocation0]]
  $region65: #{tpu_custom_call.1} parent=0
    _
  %s6 = ssub.s32 1, %s4
  %s7 = scalar_select 0, %s6, %s4
  $region1: #{tpu_custom_call.1} parent=0
    #allocation3 [shape = 'u8[16384]{0}', space=vmem, size = 0x4000, scoped, tag = 'input window, operand 0']
    #allocation4 [shape = 's32[2]{0}', space=sflag, size = 0x8, scoped, tag = 'scoped memory for tpu_custom_call.1']
    #allocation5 [shape = 's32[2]{0}', space=sflag, size = 0x8, scoped, tag = 'scoped memory for tpu_custom_call.1']
    #allocation6 [shape = 'u8[262144]{0}', space=vmem, size = 0x40000, scoped, tag = 'input window, operand 1']
    #allocation7 [shape = 's32[2]{0}', space=sflag, size = 0x8, scoped, tag = 'scoped memory for tpu_custom_call.1']
    #allocation8 [shape = 'u8[1024]{0}', space=vmem, size = 0x400, scoped, tag = 'input window, operand 2']
    #allocation9 [shape = 'u8[8192]{0}', space=vmem, size = 0x2000, scoped, tag = 'output window, operand 0']
    %8 = vsyncpa [#allocation4], 0
    %s9 = scalar_lea.sflag [#allocation4], 1
    %10 = vsyncpa %s9, 0
    %11 = vsyncpa [#allocation7], 0
    %s12 = scalar_lea.sflag [#allocation7], 1
    %13 = vsyncpa %s12, 0
    %14 = vsyncpa [#allocation5], 0
    %s15 = scalar_lea.sflag [#allocation5], 1
    %16 = vsyncpa %s15, 0
    loop: start=0, step=1, limit=8
    $region2: #{tpu_custom_call.1} parent=1 // loop_pre_header
      _
    $region3: #{tpu_custom_call.1} parent=1 // loop_header
      %s18 = sphi 0, %s22
      %p19 = scmp.ge.s32.totalorder %s18, 8
      %s25 = sphi 0, %s44
      %s26 = sphi 0, %s40
      %s27 = sphi 0, %s36
      %s28 = sphi 0, %s25
      %s29 = sphi 0, %s26
      %s30 = sphi 0, %s27
      %s31 = sphi 0, %s28
      %s32 = sphi 0, %s29
      %s33 = sphi 0, %s30
      %s49 = sphi 0, %s51
      %s52 = sphi 0, %s49
      %s53 = sphi 0, %s52
      %s69 = sphi 0, %s53
      %s77 = sphi 0, %s79
      %s80 = sphi 0, %s77
      %s81 = sphi 0, %s80
      %s97 = sphi 0, %s81
      %s103 = sphi 0, %s105
      %s106 = sphi 0, %s103
      %s107 = sphi 0, %s106
      %s123 = sphi 0, %s107
      %s131 = sphi 0, %s133
      %s134 = sphi 0, %s131
      %s135 = sphi 0, %s134
      %s151 = sphi 0, %s135
    $region4: #{tpu_custom_call.1} parent=1 // loop_header_branch
      %21 = sbr.rel (%p19) target = $region8
    $region5: #{tpu_custom_call.1} parent=1 // loop_body
      %s23 = ssub.s32 %s18, 1
      %s24 = ssub.s32 %s18, 2
      %s34 = sadd.s32 1, %s27
      %p35 = scmp.ge.s32.totalorder %s34, 2
      %s36 = scalar_select %p35, 0, %s34
      %s37 = sadd.s32 1, %s26
      %s38 = scalar_select %p35, %s37, %s26
      %p39 = scmp.ge.s32.totalorder %s38, 3
      %s40 = scalar_select %p39, 0, %s38
      %s41 = sadd.s32 1, %s25
      %s42 = scalar_select %p39, %s41, %s25
      %p43 = scmp.ge.s32.totalorder %s42, 1
      %s44 = scalar_select %p43, 0, %s42
      %s45 = ssub.s32 %s25, %s44
      %s46 = ssub.s32 %s27, %s36
      %s47 = sor.u32 %s45, %s46
      %p48 = scmp.eq.s32.totalorder %s47, 0
      %s50 = sadd.s32 %s49, 1
      %s51 = scalar_select %p48, %s49, %s50
      %p54 = pneg %p48
      %p55 = scmp.eq.s32.totalorder %s18, 5
      %p56 = por %p54, %p55
      %p57 = scmp.ne.s32.totalorder %s49, %s52
      %p58 = scmp.eq.s32.totalorder %s18, 0
      %p59 = por %p57, %p58
      %p60 = scmp.ne.s32.totalorder %s49, %s52
      %p61 = scmp.eq.s32.totalorder %s23, 5
      %p62 = por %p60, %p61
      %p63 = scmp.ne.s32.totalorder %s52, %s53
      %p64 = scmp.eq.s32.totalorder %s23, 0
      %p65 = por %p63, %p64
      %p66 = scmp.ne.s32.totalorder %s52, %s53
      %p67 = scmp.eq.s32.totalorder %s24, 5
      %p68 = por %p66, %p67
      %p70 = scmp.ne.s32.totalorder %s53, %s69
      %p71 = scmp.eq.s32.totalorder %s24, 0
      %p72 = por %p70, %p71
      %s73 = ssub.s32 %s27, %s36
      %s74 = ssub.s32 %s26, %s40
      %s75 = sor.u32 %s73, %s74
      %p76 = scmp.eq.s32.totalorder %s75, 0
      %s78 = sadd.s32 %s77, 1
      %s79 = scalar_select %p76, %s77, %s78
      %p82 = pneg %p76
      %p83 = scmp.eq.s32.totalorder %s18, 5
      %p84 = por %p82, %p83
      %p85 = scmp.ne.s32.totalorder %s77, %s80
      %p86 = scmp.eq.s32.totalorder %s18, 0
      %p87 = por %p85, %p86
      %p88 = scmp.ne.s32.totalorder %s77, %s80
      %p89 = scmp.eq.s32.totalorder %s23, 5
      %p90 = por %p88, %p89
      %p91 = scmp.ne.s32.totalorder %s80, %s81
      %p92 = scmp.eq.s32.totalorder %s23, 0
      %p93 = por %p91, %p92
      %p94 = scmp.ne.s32.totalorder %s80, %s81
      %p95 = scmp.eq.s32.totalorder %s24, 5
      %p96 = por %p94, %p95
      %p98 = scmp.ne.s32.totalorder %s81, %s97
      %p99 = scmp.eq.s32.totalorder %s24, 0
      %p100 = por %p98, %p99
      %s101 = ssub.s32 %s26, %s40
      %p102 = scmp.eq.s32.totalorder %s101, 0
      %s104 = sadd.s32 %s103, 1
      %s105 = scalar_select %p102, %s103, %s104
      %p108 = pneg %p102
      %p109 = scmp.eq.s32.totalorder %s18, 5
      %p110 = por %p108, %p109
      %p111 = scmp.ne.s32.totalorder %s103, %s106
      %p112 = scmp.eq.s32.totalorder %s18, 0
      %p113 = por %p111, %p112
      %p114 = scmp.ne.s32.totalorder %s103, %s106
      %p115 = scmp.eq.s32.totalorder %s23, 5
      %p116 = por %p114, %p115
      %p117 = scmp.ne.s32.totalorder %s106, %s107
      %p118 = scmp.eq.s32.totalorder %s23, 0
      %p119 = por %p117, %p118
      %p120 = scmp.ne.s32.totalorder %s106, %s107
      %p121 = scmp.eq.s32.totalorder %s24, 5
      %p122 = por %p120, %p121
      %p124 = scmp.ne.s32.totalorder %s107, %s123
      %p125 = scmp.eq.s32.totalorder %s24, 0
      %p126 = por %p124, %p125
      %s127 = ssub.s32 %s25, %s44
      %s128 = ssub.s32 %s26, %s40
      %s129 = sor.u32 %s127, %s128
      %p130 = scmp.eq.s32.totalorder %s129, 0
      %s132 = sadd.s32 %s131, 1
      %s133 = scalar_select %p130, %s131, %s132
      %p136 = pneg %p130
      %p137 = scmp.eq.s32.totalorder %s18, 5
      %p138 = por %p136, %p137
      %p139 = scmp.ne.s32.totalorder %s131, %s134
      %p140 = scmp.eq.s32.totalorder %s18, 0
      %p141 = por %p139, %p140
      %p142 = scmp.ne.s32.totalorder %s131, %s134
      %p143 = scmp.eq.s32.totalorder %s23, 5
      %p144 = por %p142, %p143
      %p145 = scmp.ne.s32.totalorder %s134, %s135
      %p146 = scmp.eq.s32.totalorder %s23, 0
      %p147 = por %p145, %p146
      %p148 = scmp.ne.s32.totalorder %s134, %s135
      %p149 = scmp.eq.s32.totalorder %s24, 5
      %p150 = por %p148, %p149
      %p152 = scmp.ne.s32.totalorder %s135, %s151
      %p153 = scmp.eq.s32.totalorder %s24, 0
      %p154 = por %p152, %p153
      %p155 = scmp.le.s32.totalorder 1, %s18
      %p156 = scmp.lt.s32.totalorder %s18, 7
      %p157 = pnand %p155, %p156
      %p158 = pneg %p157
      // Predicated region
      $region9: #{tpu_custom_call.1} parent=5 // pred_check
        _
      $region10: #{tpu_custom_call.1} parent=5 // pred_check_branch
        %160 = sbr.rel (%p157) target = $region12
      $region11: #{tpu_custom_call.1} parent=5 // pred_region
        %s161 = ssub.s32 %s18, 1
      $region12: #{tpu_custom_call.1} parent=5 // pred_fallthru
        _
      %p162 = scmp.lt.s32.totalorder %s18, 6
      // Predicated region
      $region13: #{tpu_custom_call.1} parent=5 // pred_check
        %p163 = pneg %p162
      $region14: #{tpu_custom_call.1} parent=5 // pred_check_branch
        %165 = sbr.rel (%p163) target = $region16
      $region15: #{tpu_custom_call.1} parent=5 // pred_region
        // Predicated region
        $region17: #{tpu_custom_call.1} parent=15 // pred_check
          %p166 = pneg %p59
        $region18: #{tpu_custom_call.1} parent=15 // pred_check_branch
          %168 = sbr.rel (%p166) target = $region20
        $region19: #{tpu_custom_call.1} parent=15 // pred_region
          %s169 = sand.u32 %s49, 1
          %s170 = scalar_lea.sflag [#allocation4], %s169
          %s171 = sand.u32 %s49, 1
          %s172 = smul.addr %s171, 16
          %s173 = scalar_lea.vmem [#allocation3], %s172
          %s174 = smul.u32 2, %s27
          %176 = vsyncadd %s170, 0
          %s177 = smul.addr %s25, 4
          %s178 = sadd.s32 %s174, %s177
          %s179 = smul.addr %s178, 8
          %s180 = scalar_lea.hbm %s0, %s179
          %s182 = sshll.u32 %s180, 4
          %s183 = int_to_ptr.hbm [resolvable:$true] %s182
          %s184 = sshll.u32 %s173, 4
          %s185 = int_to_ptr.vmem [resolvable:$true] %s184
          %187 = dma.hbm_to_vmem [thread:$0]  %s183, 256, %s185, %s170
        $region20: #{tpu_custom_call.1} parent=15 // pred_fallthru
          _
        // Predicated region
        $region21: #{tpu_custom_call.1} parent=15 // pred_check
          %p188 = pneg %p87
        $region22: #{tpu_custom_call.1} parent=15 // pred_check_branch
          %190 = sbr.rel (%p188) target = $region24
        $region23: #{tpu_custom_call.1} parent=15 // pred_region
          %s191 = sand.u32 %s18, 1
          %s192 = scalar_lea.sflag [#allocation7], %s191
          %s193 = sand.u32 %s77, 1
          %s194 = smul.addr %s193, 256
          %s195 = scalar_lea.vmem [#allocation6], %s194
          %s196 = smul.u32 32, %s27
          %198 = vsyncadd %s192, 0
          %s199 = smul.addr %s196, 3
          %s200 = sadd.s32 %s26, %s199
          %s201 = smul.addr %s200, 8
          %s202 = scalar_lea.hbm %s1, %s201
          %s203 = sshll.u32 %s202, 4
          %s204 = int_to_ptr.hbm [resolvable:$true] %s203
          %s205 = sshll.u32 %s195, 4
          %s206 = int_to_ptr.vmem [resolvable:$true] %s205
          %211 = dma.hbm_to_vmem [thread:$0]  %s204, 4096, %s206, %s192, 384, 128, 8
        $region24: #{tpu_custom_call.1} parent=15 // pred_fallthru
          _
        // Predicated region
        $region25: #{tpu_custom_call.1} parent=15 // pred_check
          %p212 = pneg %p113
        $region26: #{tpu_custom_call.1} parent=15 // pred_check_branch
          %214 = sbr.rel (%p212) target = $region28
        $region27: #{tpu_custom_call.1} parent=15 // pred_region
          %s215 = sand.u32 %s18, 1
          %s216 = scalar_lea.sflag [#allocation7], %s215
          %s217 = sand.u32 %s103, 1
          %s218 = scalar_lea.vmem [#allocation8], %s217
          %220 = vsyncadd %s216, 0
          %s221 = scalar_lea.hbm %s2, %s26
          %s223 = sshll.u32 %s221, 4
          %s224 = int_to_ptr.hbm [resolvable:$true] %s223
          %s225 = sshll.u32 %s218, 4
          %s226 = int_to_ptr.vmem [resolvable:$true] %s225
          %228 = dma.hbm_to_vmem [thread:$0]  %s224, 16, %s226, %s216
        $region28: #{tpu_custom_call.1} parent=15 // pred_fallthru
          _
      $region16: #{tpu_custom_call.1} parent=5 // pred_fallthru
        _
      %p229 = scmp.le.s32.totalorder 1, %s18
      %p230 = scmp.lt.s32.totalorder %s18, 7
      %p231 = pnand %p229, %p230
      %p232 = pneg %p231
      // Predicated region
      $region29: #{tpu_custom_call.1} parent=5 // pred_check
        _
      $region30: #{tpu_custom_call.1} parent=5 // pred_check_branch
        %234 = sbr.rel (%p231) target = $region32
      $region31: #{tpu_custom_call.1} parent=5 // pred_region
        %s235 = ssub.s32 %s18, 1
        %s236 = sand.u32 %s52, 1
        %s237 = scalar_lea.sflag [#allocation4], %s236
        %s238 = sand.u32 %s52, 1
        %s239 = smul.addr %s238, 16
        %s240 = scalar_lea.vmem [#allocation3], %s239
        // Predicated region
        $region33: #{tpu_custom_call.1} parent=31 // pred_check
          %p241 = pneg %p65
        $region34: #{tpu_custom_call.1} parent=31 // pred_check_branch
          %243 = sbr.rel (%p241) target = $region36
        $region35: #{tpu_custom_call.1} parent=31 // pred_region
          %245 = dma.done %s237, 256
        $region36: #{tpu_custom_call.1} parent=31 // pred_fallthru
          _
        %s246 = sand.u32 %s23, 1
        %s247 = scalar_lea.sflag [#allocation7], %s246
        %s248 = sand.u32 %s80, 1
        %s249 = smul.addr %s248, 256
        %s250 = scalar_lea.vmem [#allocation6], %s249
        // Predicated region
        $region37: #{tpu_custom_call.1} parent=31 // pred_check
          %p251 = pneg %p93
        $region38: #{tpu_custom_call.1} parent=31 // pred_check_branch
          %253 = sbr.rel (%p251) target = $region40
        $region39: #{tpu_custom_call.1} parent=31 // pred_region
          %255 = dma.done %s247, 4096
        $region40: #{tpu_custom_call.1} parent=31 // pred_fallthru
          _
        %s256 = sand.u32 %s23, 1
        %s257 = scalar_lea.sflag [#allocation7], %s256
        %s258 = sand.u32 %s106, 1
        %s259 = scalar_lea.vmem [#allocation8], %s258
        // Predicated region
        $region41: #{tpu_custom_call.1} parent=31 // pred_check
          %p260 = pneg %p119
        $region42: #{tpu_custom_call.1} parent=31 // pred_check_branch
          %262 = sbr.rel (%p260) target = $region44
        $region43: #{tpu_custom_call.1} parent=31 // pred_region
          %264 = dma.done %s257, 16
        $region44: #{tpu_custom_call.1} parent=31 // pred_fallthru
          _
        %s265 = sand.u32 %s52, 1
        %s266 = scalar_lea.sflag [#allocation4], %s265
        %s267 = sand.u32 %s52, 1
        %s268 = smul.addr %s267, 16
        %s269 = scalar_lea.vmem [#allocation3], %s268
        %p270 = pneg %p65
        %p271 = pneg %p62
        %s272 = sand.u32 %s23, 1
        %s273 = scalar_lea.sflag [#allocation7], %s272
        %s274 = sand.u32 %s80, 1
        %s275 = smul.addr %s274, 256
        %s276 = scalar_lea.vmem [#allocation6], %s275
        %p277 = pneg %p93
        %p278 = pneg %p90
        %s279 = sand.u32 %s23, 1
        %s280 = scalar_lea.sflag [#allocation7], %s279
        %s281 = sand.u32 %s106, 1
        %s282 = scalar_lea.vmem [#allocation8], %s281
        %p283 = pneg %p119
        %p284 = pneg %p116
        %p285 = pneg %p147
        %p286 = pneg %p144
        %s287 = sand.u32 %s134, 1
        %s288 = scalar_lea.sflag [#allocation5], %s287
        %s289 = sand.u32 %s134, 1
        %s290 = smul.addr %s289, 8
        %s291 = scalar_lea.vmem [#allocation9], %s290
        %s292 = smul.u32 2, %s30
        %s293 = smul.u32 32, %s30
        %p294 = scmp.eq.s32.totalorder %s30, 0
        // Predicated region
        $region45: #{tpu_custom_call.1} parent=31 // pred_check
          %p295 = pneg %p294
        $region46: #{tpu_custom_call.1} parent=31 // pred_check_branch
          %297 = sbr.rel (%p295) target = $region48
        $region47: #{tpu_custom_call.1} parent=31 // pred_region
          %v298 = vld [vmem:[%s259] sm:$0x1]
          %v300 = vperm.slane %v298, 0
          %302 = vst [vmem:[#allocation2] sm:$0xff] %v300
        $region48: #{tpu_custom_call.1} parent=31 // pred_fallthru
          _
        %v303 = vld [vmem:[#allocation2] sm:$0xff]
        %v304 = vld [vmem:[%s240] sm:$0xff]
        %v305 = vld [vmem:[%s240 + $0x8] sm:$0xff]
        %v306 = vld [vmem:[%s250] sm:$0xff]
        %v307 = vld [vmem:[%s250 + $0x8] sm:$0xff]
        %v308 = vld [vmem:[%s250 + $0x10] sm:$0xff]
        %v309 = vld [vmem:[%s250 + $0x18] sm:$0xff]
        %v310 = vld [vmem:[%s250 + $0x20] sm:$0xff]
        %v311 = vld [vmem:[%s250 + $0x28] sm:$0xff]
        %v312 = vld [vmem:[%s250 + $0x30] sm:$0xff]
        %v313 = vld [vmem:[%s250 + $0x38] sm:$0xff]
        %v314 = vld [vmem:[%s250 + $0x40] sm:$0xff]
        %v315 = vld [vmem:[%s250 + $0x48] sm:$0xff]
        %v316 = vld [vmem:[%s250 + $0x50] sm:$0xff]
        %v317 = vld [vmem:[%s250 + $0x58] sm:$0xff]
        %v318 = vld [vmem:[%s250 + $0x60] sm:$0xff]
        %v319 = vld [vmem:[%s250 + $0x68] sm:$0xff]
        %v320 = vld [vmem:[%s250 + $0x70] sm:$0xff]
        %v321 = vld [vmem:[%s250 + $0x78] sm:$0xff]
        %v322 = vld [vmem:[%s250 + $0x80] sm:$0xff]
        %v323 = vld [vmem:[%s250 + $0x88] sm:$0xff]
        %v324 = vld [vmem:[%s250 + $0x90] sm:$0xff]
        %v325 = vld [vmem:[%s250 + $0x98] sm:$0xff]
        %v326 = vld [vmem:[%s250 + $0xa0] sm:$0xff]
        %v327 = vld [vmem:[%s250 + $0xa8] sm:$0xff]
        %v328 = vld [vmem:[%s250 + $0xb0] sm:$0xff]
        %v329 = vld [vmem:[%s250 + $0xb8] sm:$0xff]
        %v330 = vld [vmem:[%s250 + $0xc0] sm:$0xff]
        %v331 = vld [vmem:[%s250 + $0xc8] sm:$0xff]
        %v332 = vld [vmem:[%s250 + $0xd0] sm:$0xff]
        %v333 = vld [vmem:[%s250 + $0xd8] sm:$0xff]
        %v334 = vld [vmem:[%s250 + $0xe0] sm:$0xff]
        %v335 = vld [vmem:[%s250 + $0xe8] sm:$0xff]
        %v336 = vld [vmem:[%s250 + $0xf0] sm:$0xff]
        %v337 = vld [vmem:[%s250 + $0xf8] sm:$0xff]
        %338 = vmatpush.msra.mxu0 %v321
        %339 = vmatpush.msra.mxu0 %v320
        %340 = vmatpush.msra.mxu0 %v319
        %341 = vmatpush.msra.mxu0 %v318
        %342 = vmatpush.msra.mxu0 %v317
        %343 = vmatpush.msra.mxu0 %v316
        %344 = vmatpush.msra.mxu0 %v315
        %345 = vmatpush.msra.mxu0 %v314
        %346 = vmatpush.msra.mxu0 %v313
        %347 = vmatpush.msra.mxu0 %v312
        %348 = vmatpush.msra.mxu0 %v311
        %349 = vmatpush.msra.mxu0 %v310
        %350 = vmatpush.msra.mxu0 %v309
        %351 = vmatpush.msra.mxu0 %v308
        %352 = vmatpush.msra.mxu0 %v307
        %353 = vmatpush.msra.mxu0 %v306
        %354 = vmatmul.f32.gmra.mxu0 %v304
        %v355 = vpop.f32.mrf.mxu0
        %v356 = vadd.f32 0.0, %v355
        %357 = vdwg.mxu0
        %358 = vmatpush.msra.mxu0 %v337
        %359 = vmatpush.msra.mxu0 %v336
        %360 = vmatpush.msra.mxu0 %v335
        %361 = vmatpush.msra.mxu0 %v334
        %362 = vmatpush.msra.mxu0 %v333
        %363 = vmatpush.msra.mxu0 %v332
        %364 = vmatpush.msra.mxu0 %v331
        %365 = vmatpush.msra.mxu0 %v330
        %366 = vmatpush.msra.mxu0 %v329
        %367 = vmatpush.msra.mxu0 %v328
        %368 = vmatpush.msra.mxu0 %v327
        %369 = vmatpush.msra.mxu0 %v326
        %370 = vmatpush.msra.mxu0 %v325
        %371 = vmatpush.msra.mxu0 %v324
        %372 = vmatpush.msra.mxu0 %v323
        %373 = vmatpush.msra.mxu0 %v322
        %374 = vmatmul.f32.gmra.mxu0 %v305
        %v375 = vpop.f32.mrf.mxu0
        %v376 = vadd.f32 %v356, %v375
        %377 = vdwg.mxu0
        %v378 = vadd.f32 %v303, %v376
        %379 = vst [vmem:[#allocation2] sm:$0xff] %v378
        %p380 = scmp.eq.s32.totalorder %s30, 1
        // Predicated region
        $region49: #{tpu_custom_call.1} parent=31 // pred_check
          %p381 = pneg %p380
        $region50: #{tpu_custom_call.1} parent=31 // pred_check_branch
          %383 = sbr.rel (%p381) target = $region52
        $region51: #{tpu_custom_call.1} parent=31 // pred_region
          %v384 = vld [vmem:[#allocation2] sm:$0xff]
          %385 = vst [vmem:[%s291] sm:$0xff] %v384
        $region52: #{tpu_custom_call.1} parent=31 // pred_fallthru
          _
        %s386 = sand.u32 %s134, 1
        %s387 = scalar_lea.sflag [#allocation5], %s386
        %s388 = sand.u32 %s134, 1
        %s389 = smul.addr %s388, 8
        %s390 = scalar_lea.vmem [#allocation9], %s389
        // Predicated region
        $region53: #{tpu_custom_call.1} parent=31 // pred_check
          %p391 = pneg %p144
        $region54: #{tpu_custom_call.1} parent=31 // pred_check_branch
          %393 = sbr.rel (%p391) target = $region56
        $region55: #{tpu_custom_call.1} parent=31 // pred_region
          %395 = vsyncadd %s387, 0
          %s396 = smul.addr %s28, 3
          %s397 = sadd.s32 %s29, %s396
          %s398 = smul.addr %s397, 8
          %s399 = scalar_lea.hbm %s3, %s398
          %s401 = sshll.u32 %s390, 4
          %s402 = int_to_ptr.vmem [resolvable:$true] %s401
          %s403 = sshll.u32 %s399, 4
          %s404 = int_to_ptr.hbm [resolvable:$true] %s403
          %406 = dma.vmem_to_hbm [thread:$0]  %s402, 128, %s404, %s387
        $region56: #{tpu_custom_call.1} parent=31 // pred_fallthru
          _
      $region32: #{tpu_custom_call.1} parent=5 // pred_fallthru
        _
      %p407 = scmp.le.s32.totalorder 2, %s18
      // Predicated region
      $region57: #{tpu_custom_call.1} parent=5 // pred_check
        %p408 = pneg %p407
      $region58: #{tpu_custom_call.1} parent=5 // pred_check_branch
        %410 = sbr.rel (%p408) target = $region60
      $region59: #{tpu_custom_call.1} parent=5 // pred_region
        %s411 = ssub.s32 %s18, 2
        // Predicated region
        $region61: #{tpu_custom_call.1} parent=59 // pred_check
          %p412 = pneg %p150
        $region62: #{tpu_custom_call.1} parent=59 // pred_check_branch
          %414 = sbr.rel (%p412) target = $region64
        $region63: #{tpu_custom_call.1} parent=59 // pred_region
          %s415 = sand.u32 %s135, 1
          %s416 = scalar_lea.sflag [#allocation5], %s415
          %s417 = sand.u32 %s135, 1
          %s418 = smul.addr %s417, 8
          %s419 = scalar_lea.vmem [#allocation9], %s418
          %421 = dma.done %s416, 128
        $region64: #{tpu_custom_call.1} parent=59 // pred_fallthru
          _
      $region60: #{tpu_custom_call.1} parent=5 // pred_fallthru
        _
    $region6: #{tpu_custom_call.1} parent=1 // loop_footer
      %s22 = sadd.s32 1, %s18
    $region7: #{tpu_custom_call.1} parent=1 // loop_footer_branch
      %17 = sbr.rel target = $region3
    $region8: #{tpu_custom_call.1} parent=1 // loop_exit
      _
    %422 = vsyncpa [#allocation4], 1
    %s423 = scalar_lea.sflag [#allocation4], 1
    %424 = vsyncpa %s423, 1
    %425 = vsyncpa [#allocation7], 1
    %s426 = scalar_lea.sflag [#allocation7], 1
    %427 = vsyncpa %s426, 1
    %428 = vsyncpa [#allocation5], 1
    %s429 = scalar_lea.sflag [#allocation5], 1
    %430 = vsyncpa %s429, 1

</llo_original>
